<compile_context>
chip_gen: v5e
topology: v5e:2x2
jax: 0.10.0
libtpu: 0.0.40
codegen_flags: <defaults>
</compile_context>

<pallas_src>
import jax
import jax.numpy as jnp
from jax.experimental import pallas as pl
from jax.experimental.pallas import tpu as pltpu


def mlp_kernel(x_ref, w1_ref, b1_ref, w2_ref, b2_ref, logits_ref):
    # fc1 on the MXU (native input dtype, f32 accumulation); bias + ReLU on VPU.
    h = jnp.dot(x_ref[...], w1_ref[...], preferred_element_type=jnp.float32)
    h = jnp.maximum(h + b1_ref[...].astype(jnp.float32), 0.0)          # (bt, 512) f32

    # fc2 also on the MXU (output width 1; Mosaic pads N to MXU width).  The
    # MXU is nearly idle under fc1, so this is effectively free and removes
    # the VALU/XLU reduction passes that previously bound at large bt.
    logits = jnp.dot(h, w2_ref[...].astype(jnp.float32),
                     preferred_element_type=jnp.float32)                # (bt, 1)
    logits_ref[...] = (logits + b2_ref[0, 0]).astype(logits_ref.dtype)


def _choose_batch_tile(B, block_rows, sublane):
    """Pick a batch tile that is a multiple of `sublane` (or == B) and, when
    B > sublane, guarantees at least 2 grid steps (feeds both v7x TCs)."""
    if B <= sublane:
        return B                                   # single full-batch block
    bt = min(block_rows, B)
    if bt >= B:
        # Cap so the grid has >= 2 parallel steps: round_up(ceil(B/2), sublane).
        half = (B + 1) // 2
        bt = ((half + sublane - 1) // sublane) * sublane
        return B if bt >= B else bt
    return max(sublane, (bt // sublane) * sublane)


def mlp_forward(x, w1, b1, w2, b2, *, block_rows=2048, compute_dtype=None):
    """x: [B, 144], w1: [144, 512], b1: [512], w2: [512, 1], b2: [1].

    compute_dtype=jnp.bfloat16 halves the x byte stream (useful on HBM-bound
    v5e/v6e); accumulation stays f32 and the logits output is always f32.
    """
    if compute_dtype is not None:
        x = x.astype(compute_dtype)
        w1 = w1.astype(compute_dtype)

    B, F = x.shape
    H = w1.shape[1]

    sublane = 16 if jnp.dtype(x.dtype).itemsize < 4 else 8
    bt = _choose_batch_tile(B, block_rows, sublane)
    grid = (pl.cdiv(B, bt),)

    b1_2d = b1.reshape(1, H)
    b2_2d = b2.reshape(1, 1)

    const2d = lambda i: (0, 0)
    x_bytes = jnp.dtype(x.dtype).itemsize
    w_bytes = jnp.dtype(w1.dtype).itemsize
    cost = pl.CostEstimate(
        flops=2 * B * F * H + 2 * B * H + 3 * B * H,
        transcendentals=0,
        bytes_accessed=x.size * x_bytes + B * 4
        + (w1.size + b1.size) * w_bytes + (w2.size + b2.size) * 4,
    )

    logits = pl.pallas_call(
        mlp_kernel,
        out_shape=jax.ShapeDtypeStruct((B, 1), jnp.float32),
        grid_spec=pltpu.PrefetchScalarGridSpec(
            num_scalar_prefetch=0,
            grid=grid,
            in_specs=[
                # x: streamed over the batch (double-buffered by default).
                pl.BlockSpec((bt, F), lambda i: (i, 0)),
                # Resident operands: constant index_map, single-buffered.
                pl.BlockSpec((F, H), const2d, pipeline_mode=pl.Buffered(1)),
                pl.BlockSpec((1, H), const2d, pipeline_mode=pl.Buffered(1)),
                pl.BlockSpec((H, 1), const2d, pipeline_mode=pl.Buffered(1)),
                # b2: single scalar, lives in SMEM.
                pl.BlockSpec((1, 1), const2d,
                             memory_space=pltpu.MemorySpace.SMEM),
            ],
            out_specs=pl.BlockSpec((bt, 1), lambda i: (i, 0)),
        ),
        compiler_params=pltpu.CompilerParams(
            dimension_semantics=("parallel",),
        ),
        cost_estimate=cost,
    )(x, w1, b1_2d, w2, b2_2d)

    # softmax over the size-1 class axis is identically 1.0 -> no kernel work.
    preds = jnp.ones_like(logits)
    end_points = {"Predictions": preds}
    return logits, end_points


def init_params(key):
    # Deterministic init mimicking nn.Linear defaults (uniform +/- 1/sqrt(fan_in)).
    k1, k2, k3, k4 = jax.random.split(key, 4)
    bound1 = 1.0 / jnp.sqrt(144.0)
    bound2 = 1.0 / jnp.sqrt(512.0)
    # stored already transposed: [in, out]
    w1 = jax.random.uniform(k1, (144, 512), jnp.float32, -bound1, bound1)
    b1 = jax.random.uniform(k2, (512,), jnp.float32, -bound1, bound1)
    w2 = jax.random.uniform(k3, (512, 1), jnp.float32, -bound2, bound2)
    b2 = jax.random.uniform(k4, (1,), jnp.float32, -bound2, bound2)
    return w1, b1, w2, b2


if __name__ == "__main__":
    key = jax.random.PRNGKey(0)
    kx, kp = jax.random.split(key)
    w1, b1, w2, b2 = init_params(kp)

    # B=64: even 2-step grid (bt=32).  B=52: remainder tile (bt=32, last tile
    # covers only 20 valid rows) to exercise out-of-range masking.
    for B in (64, 52):
        x = jax.random.normal(jax.random.fold_in(kx, B), (B, 144), jnp.float32)

        logits, end_points = mlp_forward(x, w1, b1, w2, b2)
        logits = jax.block_until_ready(logits)
        preds = jax.block_until_ready(end_points["Predictions"])

        # Plain-JAX reference.
        h_ref = jnp.maximum(x @ w1 + b1, 0.0)
        logits_ref = h_ref @ w2 + b2
        preds_ref = jax.nn.softmax(logits_ref, axis=-1)

        assert logits.shape == (B, 1)
        assert preds.shape == (B, 1)
        assert jnp.allclose(logits, logits_ref, atol=2e-4, rtol=2e-4)
        assert jnp.allclose(preds, preds_ref, atol=1e-6)

    print("KERNEL_OK")
</pallas_src>

<mosaic_0001>
module attributes {stable_mosaic.version = 11 : i64} {
  func.func @mlp_kernel(%arg0: i32, %arg1: memref<32x144xf32, #tpu.memory_space<vmem>>, %arg2: memref<144x512xf32, #tpu.memory_space<vmem>>, %arg3: memref<1x512xf32, #tpu.memory_space<vmem>>, %arg4: memref<512x1xf32, #tpu.memory_space<vmem>>, %arg5: memref<1x1xf32, #tpu.memory_space<smem>>, %arg6: memref<32x1xf32, #tpu.memory_space<vmem>>) attributes {dimension_semantics = [#tpu.dimension_semantics<parallel>], iteration_bounds = array<i64: 2>, scalar_prefetch = 0 : i64, scratch_operands = 0 : i64, tpu.core_type = #tpu.core_type<tc>, window_params = [{transform_indices = @transform_0, window_bounds = array<i64: 32, 144>}, {pipeline_mode = #tpu.pipeline_mode<synchronous>, transform_indices = @transform_1, window_bounds = array<i64: 144, 512>}, {pipeline_mode = #tpu.pipeline_mode<synchronous>, transform_indices = @transform_2, window_bounds = array<i64: 1, 512>}, {pipeline_mode = #tpu.pipeline_mode<synchronous>, transform_indices = @transform_3, window_bounds = array<i64: 512, 1>}, {transform_indices = @transform_4, window_bounds = array<i64: 1, 1>}, {transform_indices = @transform_5, window_bounds = array<i64: 32, 1>}]} {
    %c0 = arith.constant 0 : index
    %c0_0 = arith.constant 0 : index
    %0 = vector.load %arg1[%c0, %c0_0] : memref<32x144xf32, #tpu.memory_space<vmem>>, vector<32x144xf32>
    %c0_1 = arith.constant 0 : index
    %c0_2 = arith.constant 0 : index
    %1 = vector.load %arg2[%c0_1, %c0_2] : memref<144x512xf32, #tpu.memory_space<vmem>>, vector<144x512xf32>
    %cst = arith.constant dense<0.000000e+00> : vector<32x512xf32>
    %2 = tpu.matmul %0, %1, %cst {dimension_numbers = #tpu.dot_dimension_numbers<[1], [0], [0], [1], [0, 0, 1, 1], [], []>} : vector<32x144xf32>, vector<144x512xf32>, vector<32x512xf32> -> vector<32x512xf32>
    %c0_3 = arith.constant 0 : index
    %c0_4 = arith.constant 0 : index
    %3 = vector.load %arg3[%c0_3, %c0_4] : memref<1x512xf32, #tpu.memory_space<vmem>>, vector<1x512xf32>
    %4 = vector.broadcast %3 : vector<1x512xf32> to vector<32x512xf32>
    %5 = arith.addf %2, %4 : vector<32x512xf32>
    %cst_5 = arith.constant 0.000000e+00 : f32
    %6 = vector.broadcast %cst_5 : f32 to vector<32x512xf32>
    %7 = arith.maximumf %5, %6 : vector<32x512xf32>
    %c0_6 = arith.constant 0 : index
    %c0_7 = arith.constant 0 : index
    %8 = vector.load %arg4[%c0_6, %c0_7] : memref<512x1xf32, #tpu.memory_space<vmem>>, vector<512x1xf32>
    %cst_8 = arith.constant dense<0.000000e+00> : vector<32x1xf32>
    %9 = tpu.matmul %7, %8, %cst_8 {dimension_numbers = #tpu.dot_dimension_numbers<[1], [0], [0], [1], [0, 0, 1, 1], [], []>} : vector<32x512xf32>, vector<512x1xf32>, vector<32x1xf32> -> vector<32x1xf32>
    %c0_9 = arith.constant 0 : index
    %c0_10 = arith.constant 0 : index
    %10 = memref.load %arg5[%c0_9, %c0_10] : memref<1x1xf32, #tpu.memory_space<smem>>
    %11 = vector.broadcast %10 : f32 to vector<32x1xf32>
    %12 = arith.addf %9, %11 : vector<32x1xf32>
    %c0_11 = arith.constant 0 : index
    %c0_12 = arith.constant 0 : index
    %13 = vector.load %arg6[%c0_11, %c0_12] : memref<32x1xf32, #tpu.memory_space<vmem>>, vector<32x1xf32>
    tpu.vector_store %arg6[%c0_11, %c0_12], %12 {strides = array<i32>} : memref<32x1xf32, #tpu.memory_space<vmem>>, vector<32x1xf32>,
    return
  }
  func.func @transform_0(%arg0: i32) -> (i32, i32) {
    %c0_i32 = arith.constant 0 : i32
    %c0_i32_0 = arith.constant 0 : i32
    return %arg0, %c0_i32 : i32, i32
  }
  func.func @transform_1(%arg0: i32) -> (i32, i32) {
    %c0_i32 = arith.constant 0 : i32
    %c0_i32_0 = arith.constant 0 : i32
    %c0_i32_1 = arith.constant 0 : i32
    return %c0_i32, %c0_i32_0 : i32, i32
  }
  func.func @transform_2(%arg0: i32) -> (i32, i32) {
    %c0_i32 = arith.constant 0 : i32
    %c0_i32_0 = arith.constant 0 : i32
    %c0_i32_1 = arith.constant 0 : i32
    return %c0_i32, %c0_i32_0 : i32, i32
  }
  func.func @transform_3(%arg0: i32) -> (i32, i32) {
    %c0_i32 = arith.constant 0 : i32
    %c0_i32_0 = arith.constant 0 : i32
    %c0_i32_1 = arith.constant 0 : i32
    return %c0_i32, %c0_i32_0 : i32, i32
  }
  func.func @transform_4(%arg0: i32) -> (i32, i32) {
    %c0_i32 = arith.constant 0 : i32
    %c0_i32_0 = arith.constant 0 : i32
    %c0_i32_1 = arith.constant 0 : i32
    return %c0_i32, %c0_i32_0 : i32, i32
  }
  func.func @transform_5(%arg0: i32) -> (i32, i32) {
    %c0_i32 = arith.constant 0 : i32
    %c0_i32_0 = arith.constant 0 : i32
    return %arg0, %c0_i32 : i32, i32
  }
}

</mosaic_0001>

<llo_original>
// kernel: tpu_custom_call.1
$region0: #{tpu_custom_call.1}
  #allocation0 [shape = 'u32[]', space=smem, size = 0x4, offset = 0x4, fixed_abs, tag = 'smem constant byte address 0x4 - core index']
  #allocation1 [shape = 'u32[72,128]{1,0:T(1,128)}', space=vmem, size = 0x9000, scoped, tag = 'internal scratch']
  #allocation2 [shape = 'f32[1,1]{1,0:T(1,128)S(6)}', space=smem, size = 0x200, scoped, tag = 'scoped memory for tpu_custom_call.1']
  %s0 = inlined_call_operand.vmem [shape: f32[64,144], index: 0, kind: input, shape index: {}]
  %s1 = inlined_call_operand.hbm [shape: f32[144,512], index: 1, kind: input, shape index: {}]
  %s2 = inlined_call_operand.vmem [shape: f32[1,512], index: 2, kind: input, shape index: {}]
  %s3 = inlined_call_operand.vmem [shape: f32[512,1], index: 3, kind: input, shape index: {}]
  %s4 = inlined_call_operand.<no memory space> [shape: f32[1,1], index: 4, kind: input, shape index: {}]
  %s5 = inlined_call_operand.vmem [shape: f32[64,1], index: 5, kind: output, shape index: {}]
  %s6 = sld [smem:[#allocation0]]
  $region57: #{tpu_custom_call.1} parent=0
    _
  %s8 = ssub.s32 1, %s6
  %s9 = scalar_select 0, %s8, %s6
  %10 = sst [smem:[#allocation2]] %s4
  $region1: #{tpu_custom_call.1} parent=0
    #allocation3 [shape = 'u8[294912]{0}', space=vmem, size = 0x48000, scoped, tag = 'input window, operand 1, single buffered']
    #allocation4 [shape = 's32[2]{0}', space=sflag, size = 0x8, scoped, tag = 'scoped memory for tpu_custom_call.1']
    %11 = vsyncpa [#allocation4], 0
    loop: start=0, step=1, limit=4
    $region2: #{tpu_custom_call.1} parent=1 // loop_pre_header
      _
    $region3: #{tpu_custom_call.1} parent=1 // loop_header
      %s13 = sphi 0, %s17
      %p14 = scmp.ge.s32.totalorder %s13, 4
      %s23 = sphi 0, %s25
      %s26 = sphi 0, %s23
      %s27 = sphi 0, %s26
      %s43 = sphi 0, %s27
      %s47 = sphi 0, %s47
      %s49 = sphi 0, %s47
      %s50 = sphi 0, %s49
      %s64 = sphi 0, %s50
      %s68 = sphi 0, %s68
      %s70 = sphi 0, %s68
      %s71 = sphi 0, %s70
      %s85 = sphi 0, %s71
      %s89 = sphi 0, %s89
      %s91 = sphi 0, %s89
      %s92 = sphi 0, %s91
      %s106 = sphi 0, %s92
      %s110 = sphi 0, %s110
      %s112 = sphi 0, %s110
      %s113 = sphi 0, %s112
      %s127 = sphi 0, %s113
      %s133 = sphi 0, %s135
      %s136 = sphi 0, %s133
      %s137 = sphi 0, %s136
      %s153 = sphi 0, %s137
    $region4: #{tpu_custom_call.1} parent=1 // loop_header_branch
      %16 = sbr.rel (%p14) target = $region8
    $region5: #{tpu_custom_call.1} parent=1 // loop_body
      %s18 = ssub.s32 %s13, 1
      %s19 = ssub.s32 %s13, 2
      %s20 = sadd.s32 %s13, 1
      %s21 = ssub.s32 %s13, %s20
      %p22 = scmp.eq.s32.totalorder %s21, 0
      %s24 = sadd.s32 %s23, 1
      %s25 = scalar_select %p22, %s23, %s24
      %p28 = pneg %p22
      %p29 = scmp.eq.s32.totalorder %s13, 1
      %p30 = por %p28, %p29
      %p31 = scmp.ne.s32.totalorder %s23, %s26
      %p32 = scmp.eq.s32.totalorder %s13, 0
      %p33 = por %p31, %p32
      %p34 = scmp.ne.s32.totalorder %s23, %s26
      %p35 = scmp.eq.s32.totalorder %s18, 1
      %p36 = por %p34, %p35
      %p37 = scmp.ne.s32.totalorder %s26, %s27
      %p38 = scmp.eq.s32.totalorder %s18, 0
      %p39 = por %p37, %p38
      %p40 = scmp.ne.s32.totalorder %s26, %s27
      %p41 = scmp.eq.s32.totalorder %s19, 1
      %p42 = por %p40, %p41
      %p44 = scmp.ne.s32.totalorder %s27, %s43
      %p45 = scmp.eq.s32.totalorder %s19, 0
      %p46 = por %p44, %p45
      %s48 = sadd.s32 %s47, 1
      %p51 = scmp.eq.s32.totalorder %s13, 1
      %p52 = scmp.ne.s32.totalorder %s47, %s49
      %p53 = scmp.eq.s32.totalorder %s13, 0
      %p54 = por %p52, %p53
      %p55 = scmp.ne.s32.totalorder %s47, %s49
      %p56 = scmp.eq.s32.totalorder %s18, 1
      %p57 = por %p55, %p56
      %p58 = scmp.ne.s32.totalorder %s49, %s50
      %p59 = scmp.eq.s32.totalorder %s18, 0
      %p60 = por %p58, %p59
      %p61 = scmp.ne.s32.totalorder %s49, %s50
      %p62 = scmp.eq.s32.totalorder %s19, 1
      %p63 = por %p61, %p62
      %p65 = scmp.ne.s32.totalorder %s50, %s64
      %p66 = scmp.eq.s32.totalorder %s19, 0
      %p67 = por %p65, %p66
      %s69 = sadd.s32 %s68, 1
      %p72 = scmp.eq.s32.totalorder %s13, 1
      %p73 = scmp.ne.s32.totalorder %s68, %s70
      %p74 = scmp.eq.s32.totalorder %s13, 0
      %p75 = por %p73, %p74
      %p76 = scmp.ne.s32.totalorder %s68, %s70
      %p77 = scmp.eq.s32.totalorder %s18, 1
      %p78 = por %p76, %p77
      %p79 = scmp.ne.s32.totalorder %s70, %s71
      %p80 = scmp.eq.s32.totalorder %s18, 0
      %p81 = por %p79, %p80
      %p82 = scmp.ne.s32.totalorder %s70, %s71
      %p83 = scmp.eq.s32.totalorder %s19, 1
      %p84 = por %p82, %p83
      %p86 = scmp.ne.s32.totalorder %s71, %s85
      %p87 = scmp.eq.s32.totalorder %s19, 0
      %p88 = por %p86, %p87
      %s90 = sadd.s32 %s89, 1
      %p93 = scmp.eq.s32.totalorder %s13, 1
      %p94 = scmp.ne.s32.totalorder %s89, %s91
      %p95 = scmp.eq.s32.totalorder %s13, 0
      %p96 = por %p94, %p95
      %p97 = scmp.ne.s32.totalorder %s89, %s91
      %p98 = scmp.eq.s32.totalorder %s18, 1
      %p99 = por %p97, %p98
      %p100 = scmp.ne.s32.totalorder %s91, %s92
      %p101 = scmp.eq.s32.totalorder %s18, 0
      %p102 = por %p100, %p101
      %p103 = scmp.ne.s32.totalorder %s91, %s92
      %p104 = scmp.eq.s32.totalorder %s19, 1
      %p105 = por %p103, %p104
      %p107 = scmp.ne.s32.totalorder %s92, %s106
      %p108 = scmp.eq.s32.totalorder %s19, 0
      %p109 = por %p107, %p108
      %s111 = sadd.s32 %s110, 1
      %p114 = scmp.eq.s32.totalorder %s13, 1
      %p115 = scmp.ne.s32.totalorder %s110, %s112
      %p116 = scmp.eq.s32.totalorder %s13, 0
      %p117 = por %p115, %p116
      %p118 = scmp.ne.s32.totalorder %s110, %s112
      %p119 = scmp.eq.s32.totalorder %s18, 1
      %p120 = por %p118, %p119
      %p121 = scmp.ne.s32.totalorder %s112, %s113
      %p122 = scmp.eq.s32.totalorder %s18, 0
      %p123 = por %p121, %p122
      %p124 = scmp.ne.s32.totalorder %s112, %s113
      %p125 = scmp.eq.s32.totalorder %s19, 1
      %p126 = por %p124, %p125
      %p128 = scmp.ne.s32.totalorder %s113, %s127
      %p129 = scmp.eq.s32.totalorder %s19, 0
      %p130 = por %p128, %p129
      %s131 = ssub.s32 %s13, %s20
      %p132 = scmp.eq.s32.totalorder %s131, 0
      %s134 = sadd.s32 %s133, 1
      %s135 = scalar_select %p132, %s133, %s134
      %p138 = pneg %p132
      %p139 = scmp.eq.s32.totalorder %s13, 1
      %p140 = por %p138, %p139
      %p141 = scmp.ne.s32.totalorder %s133, %s136
      %p142 = scmp.eq.s32.totalorder %s13, 0
      %p143 = por %p141, %p142
      %p144 = scmp.ne.s32.totalorder %s133, %s136
      %p145 = scmp.eq.s32.totalorder %s18, 1
      %p146 = por %p144, %p145
      %p147 = scmp.ne.s32.totalorder %s136, %s137
      %p148 = scmp.eq.s32.totalorder %s18, 0
      %p149 = por %p147, %p148
      %p150 = scmp.ne.s32.totalorder %s136, %s137
      %p151 = scmp.eq.s32.totalorder %s19, 1
      %p152 = por %p150, %p151
      %p154 = scmp.ne.s32.totalorder %s137, %s153
      %p155 = scmp.eq.s32.totalorder %s19, 0
      %p156 = por %p154, %p155
      %p157 = scmp.le.s32.totalorder 1, %s13
      %p158 = scmp.lt.s32.totalorder %s13, 3
      %p159 = pnand %p157, %p158
      %p160 = pneg %p159
      // Predicated region
      $region9: #{tpu_custom_call.1} parent=5 // pred_check
        _
      $region10: #{tpu_custom_call.1} parent=5 // pred_check_branch
        %162 = sbr.rel (%p159) target = $region12
      $region11: #{tpu_custom_call.1} parent=5 // pred_region
        %s163 = ssub.s32 %s13, 1
        // Predicated region
        $region13: #{tpu_custom_call.1} parent=11 // pred_check
          %p164 = pneg %p60
        $region14: #{tpu_custom_call.1} parent=11 // pred_check_branch
          %166 = sbr.rel (%p164) target = $region16
        $region15: #{tpu_custom_call.1} parent=11 // pred_region
          %168 = vsyncadd [#allocation4], 0
          %s169 = sshll.u32 %s1, 4
          %s170 = int_to_ptr.hbm [resolvable:$true] %s169
          %s171 = sshll.u32 [#allocation3], 4
          %s172 = int_to_ptr.vmem [resolvable:$true] %s171
          %177 = dma.hbm_to_vmem [thread:$0]  %s170, 9216, %s172, [#allocation4], 512, 512, 32
        $region16: #{tpu_custom_call.1} parent=11 // pred_fallthru
          _
        // Predicated region
        $region17: #{tpu_custom_call.1} parent=11 // pred_check
          %p178 = pneg %p81
        $region18: #{tpu_custom_call.1} parent=11 // pred_check_branch
          %180 = sbr.rel (%p178) target = $region20
        $region19: #{tpu_custom_call.1} parent=11 // pred_region
          _
        $region20: #{tpu_custom_call.1} parent=11 // pred_fallthru
          _
        // Predicated region
        $region21: #{tpu_custom_call.1} parent=11 // pred_check
          %p181 = pneg %p102
        $region22: #{tpu_custom_call.1} parent=11 // pred_check_branch
          %183 = sbr.rel (%p181) target = $region24
        $region23: #{tpu_custom_call.1} parent=11 // pred_region
          _
        $region24: #{tpu_custom_call.1} parent=11 // pred_fallthru
          _
        // Predicated region
        $region25: #{tpu_custom_call.1} parent=11 // pred_check
          %p184 = pneg %p123
        $region26: #{tpu_custom_call.1} parent=11 // pred_check_branch
          %186 = sbr.rel (%p184) target = $region28
        $region27: #{tpu_custom_call.1} parent=11 // pred_region
          _
        $region28: #{tpu_custom_call.1} parent=11 // pred_fallthru
          _
      $region12: #{tpu_custom_call.1} parent=5 // pred_fallthru
        _
      %p187 = scmp.lt.s32.totalorder %s13, 2
      // Predicated region
      $region29: #{tpu_custom_call.1} parent=5 // pred_check
        %p188 = pneg %p187
      $region30: #{tpu_custom_call.1} parent=5 // pred_check_branch
        %190 = sbr.rel (%p188) target = $region32
      $region31: #{tpu_custom_call.1} parent=5 // pred_region
        // Predicated region
        $region33: #{tpu_custom_call.1} parent=31 // pred_check
          %p191 = pneg %p33
        $region34: #{tpu_custom_call.1} parent=31 // pred_check_branch
          %193 = sbr.rel (%p191) target = $region36
        $region35: #{tpu_custom_call.1} parent=31 // pred_region
          %s194 = smul.u32 4, %s13
          %p195 = scmp.lt.s32.totalorder %s194, 7
          %s196 = scalar_select %p195, %s194, 7
          %s197 = smul.addr %s196, 2
          %s198 = smul.addr %s197, 8
          %s199 = scalar_lea.vmem %s0, %s198
          %s200 = smul.u32 4, %s13
        $region36: #{tpu_custom_call.1} parent=31 // pred_fallthru
          _
      $region32: #{tpu_custom_call.1} parent=5 // pred_fallthru
        _
      %p201 = scmp.le.s32.totalorder 1, %s13
      %p202 = scmp.lt.s32.totalorder %s13, 3
      %p203 = pnand %p201, %p202
      %p204 = pneg %p203
      // Predicated region
      $region37: #{tpu_custom_call.1} parent=5 // pred_check
        _
      $region38: #{tpu_custom_call.1} parent=5 // pred_check_branch
        %206 = sbr.rel (%p203) target = $region40
      $region39: #{tpu_custom_call.1} parent=5 // pred_region
        %s207 = ssub.s32 %s13, 1
        // Predicated region
        $region41: #{tpu_custom_call.1} parent=39 // pred_check
          %p208 = pneg %p60
        $region42: #{tpu_custom_call.1} parent=39 // pred_check_branch
          %210 = sbr.rel (%p208) target = $region44
        $region43: #{tpu_custom_call.1} parent=39 // pred_region
          %212 = dma.done [#allocation4], 9216
        $region44: #{tpu_custom_call.1} parent=39 // pred_fallthru
          _
        %s213 = smul.u32 4, %s18
        %p214 = scmp.lt.s32.totalorder %s213, 7
        %s215 = scalar_select %p214, %s213, 7
        %s216 = smul.addr %s215, 2
        %s217 = smul.addr %s216, 8
        %s218 = scalar_lea.vmem %s0, %s217
        %p219 = pneg %p39
        %p220 = pneg %p36
        %p221 = pneg %p60
        %p222 = pneg %p57
        %p223 = pneg %p81
        %p224 = pneg %p78
        %p225 = pneg %p102
        %p226 = pneg %p99
        %p227 = pneg %p123
        %p228 = pneg %p120
        %p229 = pneg %p149
        %p230 = pneg %p146
        %s231 = smul.u32 4, %s18
        %p232 = scmp.lt.s32.totalorder %s231, 7
        %s233 = scalar_select %p232, %s231, 7
        %s234 = smul.addr %s233, 8
        %s235 = scalar_lea.vmem %s5, %s234
        %s236 = smul.u32 4, %s18
        %p237 = scmp.lt.s32.totalorder %s236, 7
        %s238 = scalar_select %p237, %s236, 7
        %s239 = smul.addr %s238, 2
        %s240 = smul.addr %s239, 8
        %s241 = scalar_lea.vmem %s0, %s240
        %s242 = smul.u32 4, %s18
        %s243 = smul.u32 4, %s18
        %p244 = scmp.lt.s32.totalorder %s243, 7
        %s245 = scalar_select %p244, %s243, 7
        %s246 = smul.addr %s245, 8
        %s247 = scalar_lea.vmem %s5, %s246
        %s248 = smul.u32 4, %s18
        %v249 = vld [vmem:[%s241] sm:$0xff]
        %v250 = vld [vmem:[%s241 + $0x8] sm:$0xff]
        %v251 = vld [vmem:[%s241 + $0x10] sm:$0xff]
        %v252 = vld [vmem:[%s241 + $0x18] sm:$0xff]
        %v253 = vld [vmem:[%s241 + $0x20] sm:$0xff]
        %v254 = vld [vmem:[%s241 + $0x28] sm:$0xff]
        %v255 = vld [vmem:[%s241 + $0x30] sm:$0xff]
        %v256 = vld [vmem:[%s241 + $0x38] sm:$0xff]
        %v257 = vld [vmem:[#allocation3] sm:$0xff]
        %v258 = vld [vmem:[#allocation3 + $0x8] sm:$0xff]
        %v259 = vld [vmem:[#allocation3 + $0x10] sm:$0xff]
        %v260 = vld [vmem:[#allocation3 + $0x18] sm:$0xff]
        %v261 = vld [vmem:[#allocation3 + $0x20] sm:$0xff]
        %v262 = vld [vmem:[#allocation3 + $0x28] sm:$0xff]
        %v263 = vld [vmem:[#allocation3 + $0x30] sm:$0xff]
        %v264 = vld [vmem:[#allocation3 + $0x38] sm:$0xff]
        %v265 = vld [vmem:[#allocation3 + $0x40] sm:$0xff]
        %v266 = vld [vmem:[#allocation3 + $0x48] sm:$0xff]
        %v267 = vld [vmem:[#allocation3 + $0x50] sm:$0xff]
        %v268 = vld [vmem:[#allocation3 + $0x58] sm:$0xff]
        %v269 = vld [vmem:[#allocation3 + $0x60] sm:$0xff]
        %v270 = vld [vmem:[#allocation3 + $0x68] sm:$0xff]
        %v271 = vld [vmem:[#allocation3 + $0x70] sm:$0xff]
        %v272 = vld [vmem:[#allocation3 + $0x78] sm:$0xff]
        %v273 = vld [vmem:[#allocation3 + $0x80] sm:$0xff]
        %v274 = vld [vmem:[#allocation3 + $0x88] sm:$0xff]
        %v275 = vld [vmem:[#allocation3 + $0x90] sm:$0xff]
        %v276 = vld [vmem:[#allocation3 + $0x98] sm:$0xff]
        %v277 = vld [vmem:[#allocation3 + $0xa0] sm:$0xff]
        %v278 = vld [vmem:[#allocation3 + $0xa8] sm:$0xff]
        %v279 = vld [vmem:[#allocation3 + $0xb0] sm:$0xff]
        %v280 = vld [vmem:[#allocation3 + $0xb8] sm:$0xff]
        %v281 = vld [vmem:[#allocation3 + $0xc0] sm:$0xff]
        %v282 = vld [vmem:[#allocation3 + $0xc8] sm:$0xff]
        %v283 = vld [vmem:[#allocation3 + $0xd0] sm:$0xff]
        %v284 = vld [vmem:[#allocation3 + $0xd8] sm:$0xff]
        %v285 = vld [vmem:[#allocation3 + $0xe0] sm:$0xff]
        %v286 = vld [vmem:[#allocation3 + $0xe8] sm:$0xff]
        %v287 = vld [vmem:[#allocation3 + $0xf0] sm:$0xff]
        %v288 = vld [vmem:[#allocation3 + $0xf8] sm:$0xff]
        %v289 = vld [vmem:[#allocation3 + $0x100] sm:$0xff]
        %v290 = vld [vmem:[#allocation3 + $0x108] sm:$0xff]
        %v291 = vld [vmem:[#allocation3 + $0x110] sm:$0xff]
        %v292 = vld [vmem:[#allocation3 + $0x118] sm:$0xff]
        %v293 = vld [vmem:[#allocation3 + $0x120] sm:$0xff]
        %v294 = vld [vmem:[#allocation3 + $0x128] sm:$0xff]
        %v295 = vld [vmem:[#allocation3 + $0x130] sm:$0xff]
        %v296 = vld [vmem:[#allocation3 + $0x138] sm:$0xff]
        %v297 = vld [vmem:[#allocation3 + $0x140] sm:$0xff]
        %v298 = vld [vmem:[#allocation3 + $0x148] sm:$0xff]
        %v299 = vld [vmem:[#allocation3 + $0x150] sm:$0xff]
        %v300 = vld [vmem:[#allocation3 + $0x158] sm:$0xff]
        %v301 = vld [vmem:[#allocation3 + $0x160] sm:$0xff]
        %v302 = vld [vmem:[#allocation3 + $0x168] sm:$0xff]
        %v303 = vld [vmem:[#allocation3 + $0x170] sm:$0xff]
        %v304 = vld [vmem:[#allocation3 + $0x178] sm:$0xff]
        %v305 = vld [vmem:[#allocation3 + $0x180] sm:$0xff]
        %v306 = vld [vmem:[#allocation3 + $0x188] sm:$0xff]
        %v307 = vld [vmem:[#allocation3 + $0x190] sm:$0xff]
        %v308 = vld [vmem:[#allocation3 + $0x198] sm:$0xff]
        %v309 = vld [vmem:[#allocation3 + $0x1a0] sm:$0xff]
        %v310 = vld [vmem:[#allocation3 + $0x1a8] sm:$0xff]
        %v311 = vld [vmem:[#allocation3 + $0x1b0] sm:$0xff]
        %v312 = vld [vmem:[#allocation3 + $0x1b8] sm:$0xff]
        %v313 = vld [vmem:[#allocation3 + $0x1c0] sm:$0xff]
        %v314 = vld [vmem:[#allocation3 + $0x1c8] sm:$0xff]
        %v315 = vld [vmem:[#allocation3 + $0x1d0] sm:$0xff]
        %v316 = vld [vmem:[#allocation3 + $0x1d8] sm:$0xff]
        %v317 = vld [vmem:[#allocation3 + $0x1e0] sm:$0xff]
        %v318 = vld [vmem:[#allocation3 + $0x1e8] sm:$0xff]
        %v319 = vld [vmem:[#allocation3 + $0x1f0] sm:$0xff]
        %v320 = vld [vmem:[#allocation3 + $0x1f8] sm:$0xff]
        %v321 = vld [vmem:[#allocation3 + $0x200] sm:$0xff]
        %v322 = vld [vmem:[#allocation3 + $0x208] sm:$0xff]
        %v323 = vld [vmem:[#allocation3 + $0x210] sm:$0xff]
        %v324 = vld [vmem:[#allocation3 + $0x218] sm:$0xff]
        %v325 = vld [vmem:[#allocation3 + $0x220] sm:$0xff]
        %v326 = vld [vmem:[#allocation3 + $0x228] sm:$0xff]
        %v327 = vld [vmem:[#allocation3 + $0x230] sm:$0xff]
        %v328 = vld [vmem:[#allocation3 + $0x238] sm:$0xff]
        %v329 = vld [vmem:[%s2] sm:$0xf]
        %v331 = vperm.slane %v329, 0
        %v332 = vperm.slane %v329, 1
        %v333 = vperm.slane %v329, 2
        %v334 = vperm.slane %v329, 3
        %vm339 = vcmask 130048
        %v341 = vsel %vm339, %v250, 0
        %v344 = vsel %vm339, %v252, 0
        %v347 = vsel %vm339, %v254, 0
        %v350 = vsel %vm339, %v256, 0
        %352 = vmatpush.msra.mxu0 %v317
        %353 = vmatpush.msra.mxu0 %v313
        %354 = vmatpush.msra.mxu0 %v309
        %355 = vmatpush.msra.mxu0 %v305
        %356 = vmatpush.msra.mxu0 %v301
        %357 = vmatpush.msra.mxu0 %v297
        %358 = vmatpush.msra.mxu0 %v293
        %359 = vmatpush.msra.mxu0 %v289
        %360 = vmatpush.msra.mxu0 %v285
        %361 = vmatpush.msra.mxu0 %v281
        %362 = vmatpush.msra.mxu0 %v277
        %363 = vmatpush.msra.mxu0 %v273
        %364 = vmatpush.msra.mxu0 %v269
        %365 = vmatpush.msra.mxu0 %v265
        %366 = vmatpush.msra.mxu0 %v261
        %367 = vmatpush.msra.mxu0 %v257
        %368 = vmatmul.f32.gmra.mxu0 %v249
        %v369 = vpop.f32.mrf.mxu0
        %v370 = vadd.f32 %v331, %v369
        %371 = vmatmul.f32.gmra.mxu0 %v251
        %v372 = vpop.f32.mrf.mxu0
        %v373 = vadd.f32 %v331, %v372
        %374 = vmatmul.f32.gmra.mxu0 %v253
        %v375 = vpop.f32.mrf.mxu0
        %v376 = vadd.f32 %v331, %v375
        %377 = vmatmul.f32.gmra.mxu0 %v255
        %v378 = vpop.f32.mrf.mxu0
        %v379 = vadd.f32 %v331, %v378
        %380 = vdwg.mxu0
        %381 = vmatpush.msra.mxu0 0.0
        %382 = vmatpush.msra.mxu0 0.0
        %383 = vmatpush.msra.mxu0 0.0
        %384 = vmatpush.msra.mxu0 0.0
        %385 = vmatpush.msra.mxu0 0.0
        %386 = vmatpush.msra.mxu0 0.0
        %387 = vmatpush.msra.mxu0 0.0
        %388 = vmatpush.msra.mxu0 0.0
        %389 = vmatpush.msra.mxu0 0.0
        %390 = vmatpush.msra.mxu0 0.0
        %391 = vmatpush.msra.mxu0 0.0
        %392 = vmatpush.msra.mxu0 0.0
        %393 = vmatpush.msra.mxu0 0.0
        %394 = vmatpush.msra.mxu0 0.0
        %395 = vmatpush.msra.mxu0 %v325
        %396 = vmatpush.msra.mxu0 %v321
        %397 = vmatmul.f32.gmra.mxu0 %v341
        %v398 = vpop.f32.mrf.mxu0
        %v399 = vadd.f32 %v370, %v398
        %400 = vmatmul.f32.gmra.mxu0 %v344
        %v401 = vpop.f32.mrf.mxu0
        %v402 = vadd.f32 %v373, %v401
        %403 = vmatmul.f32.gmra.mxu0 %v347
        %v404 = vpop.f32.mrf.mxu0
        %v405 = vadd.f32 %v376, %v404
        %406 = vmatmul.f32.gmra.mxu0 %v350
        %v407 = vpop.f32.mrf.mxu0
        %v408 = vadd.f32 %v379, %v407
        %409 = vdwg.mxu0
        %410 = vmatpush.msra.mxu0 %v318
        %411 = vmatpush.msra.mxu0 %v314
        %412 = vmatpush.msra.mxu0 %v310
        %413 = vmatpush.msra.mxu0 %v306
        %414 = vmatpush.msra.mxu0 %v302
        %415 = vmatpush.msra.mxu0 %v298
        %416 = vmatpush.msra.mxu0 %v294
        %417 = vmatpush.msra.mxu0 %v290
        %418 = vmatpush.msra.mxu0 %v286
        %419 = vmatpush.msra.mxu0 %v282
        %420 = vmatpush.msra.mxu0 %v278
        %421 = vmatpush.msra.mxu0 %v274
        %422 = vmatpush.msra.mxu0 %v270
        %423 = vmatpush.msra.mxu0 %v266
        %424 = vmatpush.msra.mxu0 %v262
        %425 = vmatpush.msra.mxu0 %v258
        %426 = vmatmul.f32.gmra.mxu0 %v249
        %v427 = vpop.f32.mrf.mxu0
        %v428 = vadd.f32 %v332, %v427
        %429 = vmatmul.f32.gmra.mxu0 %v251
        %v430 = vpop.f32.mrf.mxu0
        %v431 = vadd.f32 %v332, %v430
        %432 = vmatmul.f32.gmra.mxu0 %v253
        %v433 = vpop.f32.mrf.mxu0
        %v434 = vadd.f32 %v332, %v433
        %435 = vmatmul.f32.gmra.mxu0 %v255
        %v436 = vpop.f32.mrf.mxu0
        %v437 = vadd.f32 %v332, %v436
        %438 = vdwg.mxu0
        %439 = vmatpush.msra.mxu0 0.0
        %440 = vmatpush.msra.mxu0 0.0
        %441 = vmatpush.msra.mxu0 0.0
        %442 = vmatpush.msra.mxu0 0.0
        %443 = vmatpush.msra.mxu0 0.0
        %444 = vmatpush.msra.mxu0 0.0
        %445 = vmatpush.msra.mxu0 0.0
        %446 = vmatpush.msra.mxu0 0.0
        %447 = vmatpush.msra.mxu0 0.0
        %448 = vmatpush.msra.mxu0 0.0
        %449 = vmatpush.msra.mxu0 0.0
        %450 = vmatpush.msra.mxu0 0.0
        %451 = vmatpush.msra.mxu0 0.0
        %452 = vmatpush.msra.mxu0 0.0
        %453 = vmatpush.msra.mxu0 %v326
        %454 = vmatpush.msra.mxu0 %v322
        %455 = vmatmul.f32.gmra.mxu0 %v341
        %v456 = vpop.f32.mrf.mxu0
        %v457 = vadd.f32 %v428, %v456
        %458 = vmatmul.f32.gmra.mxu0 %v344
        %v459 = vpop.f32.mrf.mxu0
        %v460 = vadd.f32 %v431, %v459
        %461 = vmatmul.f32.gmra.mxu0 %v347
        %v462 = vpop.f32.mrf.mxu0
        %v463 = vadd.f32 %v434, %v462
        %464 = vmatmul.f32.gmra.mxu0 %v350
        %v465 = vpop.f32.mrf.mxu0
        %v466 = vadd.f32 %v437, %v465
        %467 = vdwg.mxu0
        %468 = vmatpush.msra.mxu0 %v319
        %469 = vmatpush.msra.mxu0 %v315
        %470 = vmatpush.msra.mxu0 %v311
        %471 = vmatpush.msra.mxu0 %v307
        %472 = vmatpush.msra.mxu0 %v303
        %473 = vmatpush.msra.mxu0 %v299
        %474 = vmatpush.msra.mxu0 %v295
        %475 = vmatpush.msra.mxu0 %v291
        %476 = vmatpush.msra.mxu0 %v287
        %477 = vmatpush.msra.mxu0 %v283
        %478 = vmatpush.msra.mxu0 %v279
        %479 = vmatpush.msra.mxu0 %v275
        %480 = vmatpush.msra.mxu0 %v271
        %481 = vmatpush.msra.mxu0 %v267
        %482 = vmatpush.msra.mxu0 %v263
        %483 = vmatpush.msra.mxu0 %v259
        %484 = vmatmul.f32.gmra.mxu0 %v249
        %v485 = vpop.f32.mrf.mxu0
        %v486 = vadd.f32 %v333, %v485
        %487 = vmatmul.f32.gmra.mxu0 %v251
        %v488 = vpop.f32.mrf.mxu0
        %v489 = vadd.f32 %v333, %v488
        %490 = vmatmul.f32.gmra.mxu0 %v253
        %v491 = vpop.f32.mrf.mxu0
        %v492 = vadd.f32 %v333, %v491
        %493 = vmatmul.f32.gmra.mxu0 %v255
        %v494 = vpop.f32.mrf.mxu0
        %v495 = vadd.f32 %v333, %v494
        %496 = vdwg.mxu0
        %497 = vmatpush.msra.mxu0 0.0
        %498 = vmatpush.msra.mxu0 0.0
        %499 = vmatpush.msra.mxu0 0.0
        %500 = vmatpush.msra.mxu0 0.0
        %501 = vmatpush.msra.mxu0 0.0
        %502 = vmatpush.msra.mxu0 0.0
        %503 = vmatpush.msra.mxu0 0.0
        %504 = vmatpush.msra.mxu0 0.0
        %505 = vmatpush.msra.mxu0 0.0
        %506 = vmatpush.msra.mxu0 0.0
        %507 = vmatpush.msra.mxu0 0.0
        %508 = vmatpush.msra.mxu0 0.0
        %509 = vmatpush.msra.mxu0 0.0
        %510 = vmatpush.msra.mxu0 0.0
        %511 = vmatpush.msra.mxu0 %v327
        %512 = vmatpush.msra.mxu0 %v323
        %513 = vmatmul.f32.gmra.mxu0 %v341
        %v514 = vpop.f32.mrf.mxu0
        %v515 = vadd.f32 %v486, %v514
        %516 = vmatmul.f32.gmra.mxu0 %v344
        %v517 = vpop.f32.mrf.mxu0
        %v518 = vadd.f32 %v489, %v517
        %519 = vmatmul.f32.gmra.mxu0 %v347
        %v520 = vpop.f32.mrf.mxu0
        %v521 = vadd.f32 %v492, %v520
        %522 = vmatmul.f32.gmra.mxu0 %v350
        %v523 = vpop.f32.mrf.mxu0
        %v524 = vadd.f32 %v495, %v523
        %525 = vdwg.mxu0
        %526 = vmatpush.msra.mxu0 %v320
        %527 = vmatpush.msra.mxu0 %v316
        %528 = vmatpush.msra.mxu0 %v312
        %529 = vmatpush.msra.mxu0 %v308
        %530 = vmatpush.msra.mxu0 %v304
        %531 = vmatpush.msra.mxu0 %v300
        %532 = vmatpush.msra.mxu0 %v296
        %533 = vmatpush.msra.mxu0 %v292
        %534 = vmatpush.msra.mxu0 %v288
        %535 = vmatpush.msra.mxu0 %v284
        %536 = vmatpush.msra.mxu0 %v280
        %537 = vmatpush.msra.mxu0 %v276
        %538 = vmatpush.msra.mxu0 %v272
        %539 = vmatpush.msra.mxu0 %v268
        %540 = vmatpush.msra.mxu0 %v264
        %541 = vmatpush.msra.mxu0 %v260
        %542 = vmatmul.f32.gmra.mxu0 %v249
        %v543 = vpop.f32.mrf.mxu0
        %v544 = vadd.f32 %v334, %v543
        %545 = vmatmul.f32.gmra.mxu0 %v251
        %v546 = vpop.f32.mrf.mxu0
        %v547 = vadd.f32 %v334, %v546
        %548 = vmatmul.f32.gmra.mxu0 %v253
        %v549 = vpop.f32.mrf.mxu0
        %v550 = vadd.f32 %v334, %v549
        %551 = vmatmul.f32.gmra.mxu0 %v255
        %v552 = vpop.f32.mrf.mxu0
        %v553 = vadd.f32 %v334, %v552
        %554 = vdwg.mxu0
        %555 = vmatpush.msra.mxu0 0.0
        %556 = vmatpush.msra.mxu0 0.0
        %557 = vmatpush.msra.mxu0 0.0
        %558 = vmatpush.msra.mxu0 0.0
        %559 = vmatpush.msra.mxu0 0.0
        %560 = vmatpush.msra.mxu0 0.0
        %561 = vmatpush.msra.mxu0 0.0
        %562 = vmatpush.msra.mxu0 0.0
        %563 = vmatpush.msra.mxu0 0.0
        %564 = vmatpush.msra.mxu0 0.0
        %565 = vmatpush.msra.mxu0 0.0
        %566 = vmatpush.msra.mxu0 0.0
        %567 = vmatpush.msra.mxu0 0.0
        %568 = vmatpush.msra.mxu0 0.0
        %569 = vmatpush.msra.mxu0 %v328
        %570 = vmatpush.msra.mxu0 %v324
        %571 = vmatmul.f32.gmra.mxu0 %v341
        %v572 = vpop.f32.mrf.mxu0
        %v573 = vadd.f32 %v544, %v572
        %574 = vmatmul.f32.gmra.mxu0 %v344
        %v575 = vpop.f32.mrf.mxu0
        %v576 = vadd.f32 %v547, %v575
        %577 = vmatmul.f32.gmra.mxu0 %v347
        %v578 = vpop.f32.mrf.mxu0
        %v579 = vadd.f32 %v550, %v578
        %580 = vmatmul.f32.gmra.mxu0 %v350
        %v581 = vpop.f32.mrf.mxu0
        %v582 = vadd.f32 %v553, %v581
        %583 = vdwg.mxu0
        %v584 = vmax.f32 %v399, 0.0
        %v585 = vmax.f32 %v457, 0.0
        %v586 = vmax.f32 %v515, 0.0
        %v587 = vmax.f32 %v573, 0.0
        %v588 = vmax.f32 %v402, 0.0
        %v589 = vmax.f32 %v460, 0.0
        %v590 = vmax.f32 %v518, 0.0
        %v591 = vmax.f32 %v576, 0.0
        %v592 = vmax.f32 %v405, 0.0
        %v593 = vmax.f32 %v463, 0.0
        %v594 = vmax.f32 %v521, 0.0
        %v595 = vmax.f32 %v579, 0.0
        %v596 = vmax.f32 %v408, 0.0
        %v597 = vmax.f32 %v466, 0.0
        %v598 = vmax.f32 %v524, 0.0
        %v599 = vmax.f32 %v582, 0.0
        %v600 = vld [vmem:[%s3] sm:$0xff]
        %v601 = vld [vmem:[%s3 + $0x8] sm:$0xff]
        %v602 = vld [vmem:[%s3 + $0x10] sm:$0xff]
        %v603 = vld [vmem:[%s3 + $0x18] sm:$0xff]
        %v604 = vld [vmem:[%s3 + $0x20] sm:$0xff]
        %v605 = vld [vmem:[%s3 + $0x28] sm:$0xff]
        %v606 = vld [vmem:[%s3 + $0x30] sm:$0xff]
        %v607 = vld [vmem:[%s3 + $0x38] sm:$0xff]
        %v608 = vld [vmem:[%s3 + $0x40] sm:$0xff]
        %v609 = vld [vmem:[%s3 + $0x48] sm:$0xff]
        %v610 = vld [vmem:[%s3 + $0x50] sm:$0xff]
        %v611 = vld [vmem:[%s3 + $0x58] sm:$0xff]
        %v612 = vld [vmem:[%s3 + $0x60] sm:$0xff]
        %v613 = vld [vmem:[%s3 + $0x68] sm:$0xff]
        %v614 = vld [vmem:[%s3 + $0x70] sm:$0xff]
        %v615 = vld [vmem:[%s3 + $0x78] sm:$0xff]
        %v616 = vld [vmem:[%s3 + $0x80] sm:$0xff]
        %v617 = vld [vmem:[%s3 + $0x88] sm:$0xff]
        %v618 = vld [vmem:[%s3 + $0x90] sm:$0xff]
        %v619 = vld [vmem:[%s3 + $0x98] sm:$0xff]
        %v620 = vld [vmem:[%s3 + $0xa0] sm:$0xff]
        %v621 = vld [vmem:[%s3 + $0xa8] sm:$0xff]
        %v622 = vld [vmem:[%s3 + $0xb0] sm:$0xff]
        %v623 = vld [vmem:[%s3 + $0xb8] sm:$0xff]
        %v624 = vld [vmem:[%s3 + $0xc0] sm:$0xff]
        %v625 = vld [vmem:[%s3 + $0xc8] sm:$0xff]
        %v626 = vld [vmem:[%s3 + $0xd0] sm:$0xff]
        %v627 = vld [vmem:[%s3 + $0xd8] sm:$0xff]
        %v628 = vld [vmem:[%s3 + $0xe0] sm:$0xff]
        %v629 = vld [vmem:[%s3 + $0xe8] sm:$0xff]
        %v630 = vld [vmem:[%s3 + $0xf0] sm:$0xff]
        %v631 = vld [vmem:[%s3 + $0xf8] sm:$0xff]
        %v632 = vld [vmem:[%s3 + $0x100] sm:$0xff]
        %v633 = vld [vmem:[%s3 + $0x108] sm:$0xff]
        %v634 = vld [vmem:[%s3 + $0x110] sm:$0xff]
        %v635 = vld [vmem:[%s3 + $0x118] sm:$0xff]
        %v636 = vld [vmem:[%s3 + $0x120] sm:$0xff]
        %v637 = vld [vmem:[%s3 + $0x128] sm:$0xff]
        %v638 = vld [vmem:[%s3 + $0x130] sm:$0xff]
        %v639 = vld [vmem:[%s3 + $0x138] sm:$0xff]
        %v640 = vld [vmem:[%s3 + $0x140] sm:$0xff]
        %v641 = vld [vmem:[%s3 + $0x148] sm:$0xff]
        %v642 = vld [vmem:[%s3 + $0x150] sm:$0xff]
        %v643 = vld [vmem:[%s3 + $0x158] sm:$0xff]
        %v644 = vld [vmem:[%s3 + $0x160] sm:$0xff]
        %v645 = vld [vmem:[%s3 + $0x168] sm:$0xff]
        %v646 = vld [vmem:[%s3 + $0x170] sm:$0xff]
        %v647 = vld [vmem:[%s3 + $0x178] sm:$0xff]
        %v648 = vld [vmem:[%s3 + $0x180] sm:$0xff]
        %v649 = vld [vmem:[%s3 + $0x188] sm:$0xff]
        %v650 = vld [vmem:[%s3 + $0x190] sm:$0xff]
        %v651 = vld [vmem:[%s3 + $0x198] sm:$0xff]
        %v652 = vld [vmem:[%s3 + $0x1a0] sm:$0xff]
        %v653 = vld [vmem:[%s3 + $0x1a8] sm:$0xff]
        %v654 = vld [vmem:[%s3 + $0x1b0] sm:$0xff]
        %v655 = vld [vmem:[%s3 + $0x1b8] sm:$0xff]
        %v656 = vld [vmem:[%s3 + $0x1c0] sm:$0xff]
        %v657 = vld [vmem:[%s3 + $0x1c8] sm:$0xff]
        %v658 = vld [vmem:[%s3 + $0x1d0] sm:$0xff]
        %v659 = vld [vmem:[%s3 + $0x1d8] sm:$0xff]
        %v660 = vld [vmem:[%s3 + $0x1e0] sm:$0xff]
        %v661 = vld [vmem:[%s3 + $0x1e8] sm:$0xff]
        %v662 = vld [vmem:[%s3 + $0x1f0] sm:$0xff]
        %v663 = vld [vmem:[%s3 + $0x1f8] sm:$0xff]
        %s664 = sld [smem:[#allocation2]]
        %v665 = vstv %s664
        %666 = vmatpush.msra.mxu0 %v615
        %667 = vmatpush.msra.mxu0 %v614
        %668 = vmatpush.msra.mxu0 %v613
        %669 = vmatpush.msra.mxu0 %v612
        %670 = vmatpush.msra.mxu0 %v611
        %671 = vmatpush.msra.mxu0 %v610
        %672 = vmatpush.msra.mxu0 %v609
        %673 = vmatpush.msra.mxu0 %v608
        %674 = vmatpush.msra.mxu0 %v607
        %675 = vmatpush.msra.mxu0 %v606
        %676 = vmatpush.msra.mxu0 %v605
        %677 = vmatpush.msra.mxu0 %v604
        %678 = vmatpush.msra.mxu0 %v603
        %679 = vmatpush.msra.mxu0 %v602
        %680 = vmatpush.msra.mxu0 %v601
        %681 = vmatpush.msra.mxu0 %v600
        %682 = vmatmul.f32.gmra.mxu0 %v584
        %v683 = vpop.f32.mrf.mxu0
        %v684 = vadd.f32 %v665, %v683
        %685 = vmatmul.f32.gmra.mxu0 %v588
        %v686 = vpop.f32.mrf.mxu0
        %v687 = vadd.f32 %v665, %v686
        %688 = vmatmul.f32.gmra.mxu0 %v592
        %v689 = vpop.f32.mrf.mxu0
        %v690 = vadd.f32 %v665, %v689
        %691 = vmatmul.f32.gmra.mxu0 %v596
        %v692 = vpop.f32.mrf.mxu0
        %v693 = vadd.f32 %v665, %v692
        %694 = vdwg.mxu0
        %695 = vmatpush.msra.mxu0 %v631
        %696 = vmatpush.msra.mxu0 %v630
        %697 = vmatpush.msra.mxu0 %v629
        %698 = vmatpush.msra.mxu0 %v628
        %699 = vmatpush.msra.mxu0 %v627
        %700 = vmatpush.msra.mxu0 %v626
        %701 = vmatpush.msra.mxu0 %v625
        %702 = vmatpush.msra.mxu0 %v624
        %703 = vmatpush.msra.mxu0 %v623
        %704 = vmatpush.msra.mxu0 %v622
        %705 = vmatpush.msra.mxu0 %v621
        %706 = vmatpush.msra.mxu0 %v620
        %707 = vmatpush.msra.mxu0 %v619
        %708 = vmatpush.msra.mxu0 %v618
        %709 = vmatpush.msra.mxu0 %v617
        %710 = vmatpush.msra.mxu0 %v616
        %711 = vmatmul.f32.gmra.mxu0 %v585
        %v712 = vpop.f32.mrf.mxu0
        %v713 = vadd.f32 %v684, %v712
        %714 = vmatmul.f32.gmra.mxu0 %v589
        %v715 = vpop.f32.mrf.mxu0
        %v716 = vadd.f32 %v687, %v715
        %717 = vmatmul.f32.gmra.mxu0 %v593
        %v718 = vpop.f32.mrf.mxu0
        %v719 = vadd.f32 %v690, %v718
        %720 = vmatmul.f32.gmra.mxu0 %v597
        %v721 = vpop.f32.mrf.mxu0
        %v722 = vadd.f32 %v693, %v721
        %723 = vdwg.mxu0
        %724 = vmatpush.msra.mxu0 %v647
        %725 = vmatpush.msra.mxu0 %v646
        %726 = vmatpush.msra.mxu0 %v645
        %727 = vmatpush.msra.mxu0 %v644
        %728 = vmatpush.msra.mxu0 %v643
        %729 = vmatpush.msra.mxu0 %v642
        %730 = vmatpush.msra.mxu0 %v641
        %731 = vmatpush.msra.mxu0 %v640
        %732 = vmatpush.msra.mxu0 %v639
        %733 = vmatpush.msra.mxu0 %v638
        %734 = vmatpush.msra.mxu0 %v637
        %735 = vmatpush.msra.mxu0 %v636
        %736 = vmatpush.msra.mxu0 %v635
        %737 = vmatpush.msra.mxu0 %v634
        %738 = vmatpush.msra.mxu0 %v633
        %739 = vmatpush.msra.mxu0 %v632
        %740 = vmatmul.f32.gmra.mxu0 %v586
        %v741 = vpop.f32.mrf.mxu0
        %v742 = vadd.f32 %v713, %v741
        %743 = vmatmul.f32.gmra.mxu0 %v590
        %v744 = vpop.f32.mrf.mxu0
        %v745 = vadd.f32 %v716, %v744
        %746 = vmatmul.f32.gmra.mxu0 %v594
        %v747 = vpop.f32.mrf.mxu0
        %v748 = vadd.f32 %v719, %v747
        %749 = vmatmul.f32.gmra.mxu0 %v598
        %v750 = vpop.f32.mrf.mxu0
        %v751 = vadd.f32 %v722, %v750
        %752 = vdwg.mxu0
        %753 = vmatpush.msra.mxu0 %v663
        %754 = vmatpush.msra.mxu0 %v662
        %755 = vmatpush.msra.mxu0 %v661
        %756 = vmatpush.msra.mxu0 %v660
        %757 = vmatpush.msra.mxu0 %v659
        %758 = vmatpush.msra.mxu0 %v658
        %759 = vmatpush.msra.mxu0 %v657
        %760 = vmatpush.msra.mxu0 %v656
        %761 = vmatpush.msra.mxu0 %v655
        %762 = vmatpush.msra.mxu0 %v654
        %763 = vmatpush.msra.mxu0 %v653
        %764 = vmatpush.msra.mxu0 %v652
        %765 = vmatpush.msra.mxu0 %v651
        %766 = vmatpush.msra.mxu0 %v650
        %767 = vmatpush.msra.mxu0 %v649
        %768 = vmatpush.msra.mxu0 %v648
        %769 = vmatmul.f32.gmra.mxu0 %v587
        %v770 = vpop.f32.mrf.mxu0
        %v771 = vadd.f32 %v742, %v770
        %772 = vmatmul.f32.gmra.mxu0 %v591
        %v773 = vpop.f32.mrf.mxu0
        %v774 = vadd.f32 %v745, %v773
        %775 = vmatmul.f32.gmra.mxu0 %v595
        %v776 = vpop.f32.mrf.mxu0
        %v777 = vadd.f32 %v748, %v776
        %778 = vmatmul.f32.gmra.mxu0 %v599
        %v779 = vpop.f32.mrf.mxu0
        %v780 = vadd.f32 %v751, %v779
        %781 = vdwg.mxu0
        %vm782 = vcmask 7168
        %783 = vst.msk [vmem:[%s247] sm:$0xff] %vm782, %v771
        %784 = vst.msk [vmem:[%s247 + $0x8] sm:$0xff] %vm782, %v774
        %785 = vst.msk [vmem:[%s247 + $0x10] sm:$0xff] %vm782, %v777
        %786 = vst.msk [vmem:[%s247 + $0x18] sm:$0xff] %vm782, %v780
        %s787 = smul.u32 4, %s18
        %p788 = scmp.lt.s32.totalorder %s787, 7
        %s789 = scalar_select %p788, %s787, 7
        %s790 = smul.addr %s789, 8
        %s791 = scalar_lea.vmem %s5, %s790
        // Predicated region
        $region45: #{tpu_custom_call.1} parent=39 // pred_check
          %p792 = pneg %p146
        $region46: #{tpu_custom_call.1} parent=39 // pred_check_branch
          %794 = sbr.rel (%p792) target = $region48
        $region47: #{tpu_custom_call.1} parent=39 // pred_region
          %s795 = smul.u32 4, %s18
        $region48: #{tpu_custom_call.1} parent=39 // pred_fallthru
          _
      $region40: #{tpu_custom_call.1} parent=5 // pred_fallthru
        _
      %p796 = scmp.le.s32.totalorder 2, %s13
      // Predicated region
      $region49: #{tpu_custom_call.1} parent=5 // pred_check
        %p797 = pneg %p796
      $region50: #{tpu_custom_call.1} parent=5 // pred_check_branch
        %799 = sbr.rel (%p797) target = $region52
      $region51: #{tpu_custom_call.1} parent=5 // pred_region
        %s800 = ssub.s32 %s13, 2
        // Predicated region
        $region53: #{tpu_custom_call.1} parent=51 // pred_check
          %p801 = pneg %p152
        $region54: #{tpu_custom_call.1} parent=51 // pred_check_branch
          %803 = sbr.rel (%p801) target = $region56
        $region55: #{tpu_custom_call.1} parent=51 // pred_region
          %s804 = smul.u32 4, %s19
          %p805 = scmp.lt.s32.totalorder %s804, 7
          %s806 = scalar_select %p805, %s804, 7
          %s807 = smul.addr %s806, 8
          %s808 = scalar_lea.vmem %s5, %s807
        $region56: #{tpu_custom_call.1} parent=51 // pred_fallthru
          _
      $region52: #{tpu_custom_call.1} parent=5 // pred_fallthru
        _
    $region6: #{tpu_custom_call.1} parent=1 // loop_footer
      %s17 = sadd.s32 1, %s13
    $region7: #{tpu_custom_call.1} parent=1 // loop_footer_branch
      %12 = sbr.rel target = $region3
    $region8: #{tpu_custom_call.1} parent=1 // loop_exit
      _
    %809 = vsyncpa [#allocation4], 1
    %s810 = scalar_lea.sflag [#allocation4], 1
    %811 = vsyncpa %s810, 1

</llo_original>
